<compile_context>
chip_gen: v6e
topology: v6e:2x2x1
jax: 0.10.0
libtpu: 0.0.40
codegen_flags: <defaults>
</compile_context>

<pallas_src>
import functools

import jax
import jax.numpy as jnp
from jax import lax
from jax.experimental import pallas as pl
from jax.experimental.pallas import tpu as pltpu


_LANE = 128
_TARGET_TILE_BYTES = 4 << 20  # ~4 MiB of W streamed per grid step


def _cdiv(a, b):
    return (a + b - 1) // b


def _round_up(x, m):
    return _cdiv(x, m) * m


def _round_down(x, m):
    return (x // m) * m


def _sublane_multiple(dtype):
    itemsize = jnp.dtype(dtype).itemsize
    return max(8, 32 // itemsize)  # 8 for 4-byte, 16 for 2-byte, 32 for 1-byte


def _padded_tile_bytes(rows, cols, dtype):
    """VMEM footprint of one (rows, cols) buffer after (sublane, lane) padding."""
    it = jnp.dtype(dtype).itemsize
    return _round_up(rows, _sublane_multiple(dtype)) * _round_up(cols, _LANE) * it


def _choose_tiles(features_in, features_out, w_dtype):
    """Dtype-aware, bytes-based tile selection for streaming W."""
    itemsize = jnp.dtype(w_dtype).itemsize
    sublane_mult = _sublane_multiple(w_dtype)
    target_elems = max(_TARGET_TILE_BYTES // itemsize, _LANE * sublane_mult)

    # Lane axis first (contiguous HBM dim of row-major W): wide-and-short.
    if features_out <= _LANE:
        tile_n = features_out                           # full extent: always legal
    else:
        tile_n = min(_round_down(features_out, _LANE), 2048)

    # Row axis fills the remaining byte budget.
    if features_in <= sublane_mult:
        tile_m = features_in                            # full extent: always legal
    else:
        rows = max(target_elems // tile_n, sublane_mult)
        tile_m = max(
            sublane_mult,
            min(_round_down(features_in, sublane_mult),
                _round_down(rows, sublane_mult),
                1024),
        )

    # Guarantee a few grid blocks when W is big enough to matter, so both v7x
    # TensorCores get work and each core has a multi-step grid to pipeline.
    min_blocks = 4
    if features_in * features_out * itemsize >= (2 << 20):
        def blocks(tm, tn):
            return _cdiv(features_in, tm) * _cdiv(features_out, tn)

        while blocks(tile_m, tile_n) < min_blocks and tile_n >= 2 * _LANE:
            tile_n = _round_up(tile_n // 2, _LANE)
        while blocks(tile_m, tile_n) < min_blocks and tile_m >= 2 * sublane_mult:
            tile_m = _round_up(tile_m // 2, sublane_mult)

    return tile_m, tile_n


def _lora_kernel(w_ref, b_ref, a_ref, o_ref, *, scale):
    # w_ref: (tile_m, tile_n)  original-weight tile
    # b_ref: (tile_m, rank)    lora_B row tile (resident across the inner j loop)
    # a_ref: (rank, tile_n)    lora_A column tile
    # Low-rank delta on the MXU with f32 accumulation.  HIGHEST precision is
    # free here: the kernel is HBM-bound and the MXU is otherwise idle.
    delta = jnp.dot(
        b_ref[...], a_ref[...],
        preferred_element_type=jnp.float32,
        precision=lax.Precision.HIGHEST,
    )
    w = w_ref[...]
    if w.dtype != jnp.float32:
        w = w.astype(jnp.float32)
    o_ref[...] = (w + delta * scale).astype(o_ref.dtype)


def lora_parametrization_forward(
    original_weights,
    lora_B,
    lora_A,
    *,
    alpha=1,
    enabled=True,
    tile_m=None,
    tile_n=None,
    donate_weights=False,
):
    """W + (lora_B @ lora_A).reshape(W.shape) * (alpha / rank), in Pallas."""
    features_in, rank = lora_B.shape
    rank_a, features_out = lora_A.shape
    assert rank == rank_a, "lora_B / lora_A rank mismatch"
    assert original_weights.size == features_in * features_out

    if not enabled:
        # Identity: no kernel launch, no HBM round-trip.
        return original_weights

    scale = float(alpha) / float(rank)
    w2d = original_weights.reshape(features_in, features_out)
    w_dtype = w2d.dtype
    sublane_mult = _sublane_multiple(w_dtype)

    auto_m, auto_n = _choose_tiles(features_in, features_out, w_dtype)
    tile_m = auto_m if tile_m is None else tile_m
    tile_n = auto_n if tile_n is None else tile_n
    assert tile_n == features_out or (tile_n > 0 and tile_n % _LANE == 0), \
        "tile_n must be a multiple of 128 or the full extent"
    assert tile_m == features_in or (tile_m > 0 and tile_m % sublane_mult == 0), \
        "tile_m must be a multiple of the sublane multiple or the full extent"

    grid = (_cdiv(features_in, tile_m), _cdiv(features_out, tile_n))

    # VMEM budget: double-buffered in/out tiles + the f32 delta intermediate
    # + the f32 upcast of W when W is sub-f32, plus fixed Mosaic headroom,
    # capped against this generation's actual VMEM capacity.
    is_f32_w = jnp.dtype(w_dtype) == jnp.dtype(jnp.float32)
    vmem_budget = (
        2 * _padded_tile_bytes(tile_m, tile_n, w_dtype)          # W tiles (dbl-buf)
        + 2 * _padded_tile_bytes(tile_m, tile_n, w_dtype)        # out tiles (dbl-buf)
        + 2 * _padded_tile_bytes(tile_m, rank, lora_B.dtype)     # B rows (dbl-buf)
        + 2 * _padded_tile_bytes(rank, tile_n, lora_A.dtype)     # A cols (dbl-buf)
        + _padded_tile_bytes(tile_m, tile_n, jnp.float32)        # f32 delta
        + (0 if is_f32_w else _padded_tile_bytes(tile_m, tile_n, jnp.float32))
    )
    try:
        vmem_capacity = int(pltpu.get_tpu_info().vmem_capacity_bytes)
    except Exception:
        vmem_capacity = 64 << 20  # conservative fallback: v7x per-TC VMEM
    vmem_limit = min(int(vmem_budget) + (8 << 20), (2 * vmem_capacity) // 3)
    vmem_limit = max(vmem_limit, 16 << 20)

    kernel = functools.partial(_lora_kernel, scale=scale)

    # Grid order (i, j): j (lane/column blocks) is the inner axis, so the tiny
    # lora_B row tile (indexed only by i) stays resident across the inner loop.
    out2d = pl.pallas_call(
        kernel,
        out_shape=jax.ShapeDtypeStruct((features_in, features_out), w_dtype),
        grid_spec=pltpu.PrefetchScalarGridSpec(
            num_scalar_prefetch=0,
            grid=grid,
            in_specs=[
                pl.BlockSpec((tile_m, tile_n), lambda i, j: (i, j)),  # W tile
                pl.BlockSpec((tile_m, rank), lambda i, j: (i, 0)),    # lora_B rows
                pl.BlockSpec((rank, tile_n), lambda i, j: (0, j)),    # lora_A cols
            ],
            out_specs=pl.BlockSpec((tile_m, tile_n), lambda i, j: (i, j)),
        ),
        compiler_params=pltpu.CompilerParams(
            dimension_semantics=("parallel", "parallel"),
            vmem_limit_bytes=int(vmem_limit),
        ),
        # Real in-place update only if the caller actually donates the weight
        # buffer at the jit boundary; otherwise XLA inserts a copy (harmless).
        input_output_aliases={0: 0} if donate_weights else {},
    )(w2d, lora_B, lora_A)

    # .view(original_weights.shape) in the PyTorch module.
    return out2d.reshape(original_weights.shape)


if __name__ == "__main__":
    key = jax.random.PRNGKey(0)
    k_w, k_a, k_b, k_w2, k_a2, k_b2 = jax.random.split(key, 6)

    def reference(w, b, a, scale):
        delta = jnp.dot(b, a, precision=lax.Precision.HIGHEST)
        return w + delta.reshape(w.shape) * scale

    # ---- Case 1: module-sized shapes, automatic tile selection -------------
    features_in, features_out, rank, alpha = 16, 256, 4, 2
    W = jax.random.normal(k_w, (features_in, features_out), jnp.float32)
    # lora_A ~ Normal(0, 1) per the module's init; lora_B init is zeros in the
    # module but made nonzero here so the fused matmul path is exercised.
    A = jax.random.normal(k_a, (rank, features_out), jnp.float32)
    B = jax.random.normal(k_b, (features_in, rank), jnp.float32)

    out = jax.block_until_ready(
        lora_parametrization_forward(W, B, A, alpha=alpha, enabled=True))
    ref = reference(W, B, A, alpha / rank)
    assert out.shape == W.shape and out.dtype == W.dtype
    assert jnp.allclose(out, ref, atol=1e-5, rtol=1e-5), "case 1 mismatch"

    # ---- Case 2: forced multi-block grid with a ragged lane edge -----------
    fi2, fo2, r2 = 24, 320, 3          # 320 = 2*128 + 64 -> ragged last block
    W2 = jax.random.normal(k_w2, (fi2, fo2), jnp.float32)
    A2 = jax.random.normal(k_a2, (r2, fo2), jnp.float32)
    B2 = jax.random.normal(k_b2, (fi2, r2), jnp.float32)
    out2 = jax.block_until_ready(
        lora_parametrization_forward(W2, B2, A2, alpha=1, tile_m=8, tile_n=128))
    ref2 = reference(W2, B2, A2, 1.0 / r2)
    assert jnp.allclose(out2, ref2, atol=1e-5, rtol=1e-5), "case 2 mismatch"

    # ---- Case 3: disabled path is the identity (no kernel launch) ----------
    out3 = jax.block_until_ready(
        lora_parametrization_forward(W, B, A, alpha=alpha, enabled=False))
    assert jnp.array_equal(out3, W)

    print("KERNEL_OK")
</pallas_src>

<mosaic_0001>
module attributes {stable_mosaic.version = 11 : i64} {
  func.func @_lora_kernel(%arg0: i32, %arg1: i32, %arg2: memref<16x256xf32, #tpu.memory_space<vmem>>, %arg3: memref<16x4xf32, #tpu.memory_space<vmem>>, %arg4: memref<4x256xf32, #tpu.memory_space<vmem>>, %arg5: memref<16x256xf32, #tpu.memory_space<vmem>>) attributes {dimension_semantics = [#tpu.dimension_semantics<parallel>, #tpu.dimension_semantics<parallel>], iteration_bounds = array<i64: 1, 1>, scalar_prefetch = 0 : i64, scratch_operands = 0 : i64, tpu.core_type = #tpu.core_type<tc>, window_params = [{transform_indices = @transform_0, window_bounds = array<i64: 16, 256>}, {transform_indices = @transform_1, window_bounds = array<i64: 16, 4>}, {transform_indices = @transform_2, window_bounds = array<i64: 4, 256>}, {transform_indices = @transform_3, window_bounds = array<i64: 16, 256>}]} {
    %c0 = arith.constant 0 : index
    %c0_0 = arith.constant 0 : index
    %0 = vector.load %arg3[%c0, %c0_0] : memref<16x4xf32, #tpu.memory_space<vmem>>, vector<16x4xf32>
    %c0_1 = arith.constant 0 : index
    %c0_2 = arith.constant 0 : index
    %1 = vector.load %arg4[%c0_1, %c0_2] : memref<4x256xf32, #tpu.memory_space<vmem>>, vector<4x256xf32>
    %cst = arith.constant dense<0.000000e+00> : vector<16x256xf32>
    %2 = tpu.matmul %0, %1, %cst {dimension_numbers = #tpu.dot_dimension_numbers<[1], [0], [0], [1], [0, 0, 1, 1], [], []>, precision = #tpu.contract_precision<fp32>} : vector<16x4xf32>, vector<4x256xf32>, vector<16x256xf32> -> vector<16x256xf32>
    %c0_3 = arith.constant 0 : index
    %c0_4 = arith.constant 0 : index
    %3 = vector.load %arg2[%c0_3, %c0_4] : memref<16x256xf32, #tpu.memory_space<vmem>>, vector<16x256xf32>
    %cst_5 = arith.constant 5.000000e-01 : f32
    %4 = vector.broadcast %cst_5 : f32 to vector<16x256xf32>
    %5 = arith.mulf %2, %4 : vector<16x256xf32>
    %6 = arith.addf %3, %5 : vector<16x256xf32>
    %c0_6 = arith.constant 0 : index
    %c0_7 = arith.constant 0 : index
    %7 = vector.load %arg5[%c0_6, %c0_7] : memref<16x256xf32, #tpu.memory_space<vmem>>, vector<16x256xf32>
    tpu.vector_store %arg5[%c0_6, %c0_7], %6 {strides = array<i32>} : memref<16x256xf32, #tpu.memory_space<vmem>>, vector<16x256xf32>,
    return
  }
  func.func @transform_0(%arg0: i32, %arg1: i32) -> (i32, i32) {
    %c0_i32 = arith.constant 0 : i32
    return %arg0, %arg1 : i32, i32
  }
  func.func @transform_1(%arg0: i32, %arg1: i32) -> (i32, i32) {
    %c0_i32 = arith.constant 0 : i32
    %c0_i32_0 = arith.constant 0 : i32
    return %arg0, %c0_i32 : i32, i32
  }
  func.func @transform_2(%arg0: i32, %arg1: i32) -> (i32, i32) {
    %c0_i32 = arith.constant 0 : i32
    %c0_i32_0 = arith.constant 0 : i32
    return %c0_i32, %arg1 : i32, i32
  }
  func.func @transform_3(%arg0: i32, %arg1: i32) -> (i32, i32) {
    %c0_i32 = arith.constant 0 : i32
    return %arg0, %arg1 : i32, i32
  }
}

</mosaic_0001>

<llo_original>
// kernel: tpu_custom_call.1
$region0: #{tpu_custom_call.1}
  #allocation0 [shape = 'u32[]', space=smem, size = 0x4, offset = 0x4, fixed_abs, tag = 'smem constant byte address 0x4 - core index']
  #allocation1 [shape = 'u32[144,128]{1,0:T(1,128)}', space=vmem, size = 0x12000, scoped, tag = 'internal scratch']
  %s0 = inlined_call_operand.hbm [shape: f32[16,256], index: 0, kind: input, shape index: {}]
  %s1 = inlined_call_operand.vmem [shape: f32[16,4], index: 1, kind: input, shape index: {}]
  %s2 = inlined_call_operand.vmem [shape: f32[4,256], index: 2, kind: input, shape index: {}]
  %s3 = inlined_call_operand.hbm [shape: f32[16,256], index: 3, kind: output, shape index: {}]
  %s4 = sld [smem:[#allocation0]]
  $region26: #{tpu_custom_call.1} parent=0
    _
  %s6 = ssub.s32 1, %s4
  %s7 = scalar_select 0, %s6, %s4
  $region1: #{tpu_custom_call.1} parent=0
    #allocation2 [shape = 'u8[16384]{0}', space=vmem, size = 0x4000, scoped, tag = 'input window, operand 0, single buffered']
    #allocation3 [shape = 's32[1]{0}', space=sflag, size = 0x4, scoped, tag = 'scoped memory for tpu_custom_call.1']
    #allocation4 [shape = 's32[1]{0}', space=sflag, size = 0x4, scoped, tag = 'scoped memory for tpu_custom_call.1']
    #allocation5 [shape = 'u8[16384]{0}', space=vmem, size = 0x4000, scoped, tag = 'output window, operand 0, single buffered']
    %8 = vsyncpa [#allocation3], 0
    %9 = vsyncpa [#allocation4], 0
    // Predicated region
    $region2: #{tpu_custom_call.1} parent=1 // pred_check
      _
    $region3: #{tpu_custom_call.1} parent=1 // pred_check_branch
      %11 = sbr.rel (0) target = $region5
    $region4: #{tpu_custom_call.1} parent=1 // pred_region
      %s13 = ssub.s32 512, 512
      %14 = vsyncadd [#allocation3], %s13
      %s15 = sshll.u32 [#allocation2], 4
      %s16 = int_to_ptr.vmem [resolvable:$true] %s15
      %21 = dma.hbm_to_vmem [thread:$0]  %s0, 512, %s16, [#allocation3], 256, 256, 16
    $region5: #{tpu_custom_call.1} parent=1 // pred_fallthru
      _
    // Predicated region
    $region6: #{tpu_custom_call.1} parent=1 // pred_check
      _
    $region7: #{tpu_custom_call.1} parent=1 // pred_check_branch
      %23 = sbr.rel (0) target = $region9
    $region8: #{tpu_custom_call.1} parent=1 // pred_region
      _
    $region9: #{tpu_custom_call.1} parent=1 // pred_fallthru
      _
    // Predicated region
    $region10: #{tpu_custom_call.1} parent=1 // pred_check
      _
    $region11: #{tpu_custom_call.1} parent=1 // pred_check_branch
      %25 = sbr.rel (0) target = $region13
    $region12: #{tpu_custom_call.1} parent=1 // pred_region
      _
    $region13: #{tpu_custom_call.1} parent=1 // pred_fallthru
      _
    // Predicated region
    $region14: #{tpu_custom_call.1} parent=1 // pred_check
      _
    $region15: #{tpu_custom_call.1} parent=1 // pred_check_branch
      %27 = sbr.rel (0) target = $region17
    $region16: #{tpu_custom_call.1} parent=1 // pred_region
      %28 = dma.done [#allocation3], 512
    $region17: #{tpu_custom_call.1} parent=1 // pred_fallthru
      _
    %v29 = vld [vmem:[%s1] sm:$0xff]
    %v30 = vld [vmem:[%s1 + $0x8] sm:$0xff]
    %v31 = vld [vmem:[%s2] sm:$0xff]
    %v33 = vcombine.high %v31, %v31
    %vm34 = vcmask 31744
    %v36 = vsel %vm34, %v29, 0
    %v39 = vsel %vm34, %v30, 0
    %vm41 = vcmask 1043456
    %v42 = vsel %vm41, %v31, 0
    %v44 = vsel %vm41, %v33, 0
    %46 = vmatprep.subr.mxu0 0.0
    %47 = vmatpush1.msra.mxu0 0.0
    %48 = vmatprep.subr.mxu0 0.0
    %49 = vmatpush1.msra.mxu0 0.0
    %50 = vmatprep.subr.mxu0 0.0
    %51 = vmatpush1.msra.mxu0 0.0
    %52 = vmatprep.subr.mxu0 0.0
    %53 = vmatpush1.msra.mxu0 0.0
    %54 = vmatprep.subr.mxu0 0.0
    %55 = vmatpush1.msra.mxu0 0.0
    %56 = vmatprep.subr.mxu0 0.0
    %57 = vmatpush1.msra.mxu0 0.0
    %58 = vmatprep.subr.mxu0 0.0
    %59 = vmatpush1.msra.mxu0 0.0
    %60 = vmatprep.subr.mxu0 0.0
    %61 = vmatpush1.msra.mxu0 0.0
    %62 = vmatprep.subr.mxu0 0.0
    %63 = vmatpush1.msra.mxu0 0.0
    %64 = vmatprep.subr.mxu0 0.0
    %65 = vmatpush1.msra.mxu0 0.0
    %66 = vmatprep.subr.mxu0 0.0
    %67 = vmatpush1.msra.mxu0 0.0
    %68 = vmatprep.subr.mxu0 0.0
    %69 = vmatpush1.msra.mxu0 0.0
    %70 = vmatprep.subr.mxu0 0.0
    %71 = vmatpush1.msra.mxu0 0.0
    %72 = vmatprep.subr.mxu0 0.0
    %73 = vmatpush1.msra.mxu0 0.0
    %74 = vmatprep.subr.mxu0 0.0
    %75 = vmatpush1.msra.mxu0 0.0
    %v76 = vand.u32 %v44, 4294901760
    %77 = vmatprep.subr.mxu0 %v76
    %v78 = vand.u32 %v42, 4294901760
    %79 = vmatpush1.msra.mxu0 %v78
    %80 = vmatprep.subr.mxu0 0.0
    %81 = vmatpush2.msra.mxu0 0.0
    %82 = vmatprep.subr.mxu0 0.0
    %83 = vmatpush2.msra.mxu0 0.0
    %84 = vmatprep.subr.mxu0 0.0
    %85 = vmatpush2.msra.mxu0 0.0
    %86 = vmatprep.subr.mxu0 0.0
    %87 = vmatpush2.msra.mxu0 0.0
    %88 = vmatprep.subr.mxu0 0.0
    %89 = vmatpush2.msra.mxu0 0.0
    %90 = vmatprep.subr.mxu0 0.0
    %91 = vmatpush2.msra.mxu0 0.0
    %92 = vmatprep.subr.mxu0 0.0
    %93 = vmatpush2.msra.mxu0 0.0
    %94 = vmatprep.subr.mxu0 0.0
    %95 = vmatpush2.msra.mxu0 0.0
    %96 = vmatprep.subr.mxu0 0.0
    %97 = vmatpush2.msra.mxu0 0.0
    %98 = vmatprep.subr.mxu0 0.0
    %99 = vmatpush2.msra.mxu0 0.0
    %100 = vmatprep.subr.mxu0 0.0
    %101 = vmatpush2.msra.mxu0 0.0
    %102 = vmatprep.subr.mxu0 0.0
    %103 = vmatpush2.msra.mxu0 0.0
    %104 = vmatprep.subr.mxu0 0.0
    %105 = vmatpush2.msra.mxu0 0.0
    %106 = vmatprep.subr.mxu0 0.0
    %107 = vmatpush2.msra.mxu0 0.0
    %108 = vmatprep.subr.mxu0 0.0
    %109 = vmatpush2.msra.mxu0 0.0
    %110 = vmatprep.subr.mxu0 0.0
    %111 = vmatpush2.msra.mxu0 0.0
    %112 = vmatprep.mubr.f32.mxu0 0.0
    %v113 = vand.u32 %v36, 4294901760
    %v114 = vsub.f32 %v36, %v113
    %v115 = vand.u32 %v114, 4294901760
    %v116 = vsub.f32 %v114, %v115
    %v117 = vand.u32 %v116, 4294901760
    %118 = vmatmul.mubr.f32.gmra.mxu0 %v117
    %v119 = vpop.f32.mrf.mxu0
    %v120 = vadd.f32 0.0, %v119
    %v121 = vpop.f32.mrf.mxu0
    %v122 = vadd.f32 0.0, %v121
    %123 = vmatprep.mubr.f32.mxu0 0.0
    %v124 = vand.u32 %v39, 4294901760
    %v125 = vsub.f32 %v39, %v124
    %v126 = vand.u32 %v125, 4294901760
    %v127 = vsub.f32 %v125, %v126
    %v128 = vand.u32 %v127, 4294901760
    %129 = vmatmul.mubr.f32.gmra.mxu0 %v128
    %v130 = vpop.f32.mrf.mxu0
    %v131 = vadd.f32 0.0, %v130
    %v132 = vpop.f32.mrf.mxu0
    %v133 = vadd.f32 0.0, %v132
    %134 = vdwg.mxu0
    %135 = vmatprep.subr.mxu0 0.0
    %136 = vmatpush1.msra.mxu0 0.0
    %137 = vmatprep.subr.mxu0 0.0
    %138 = vmatpush1.msra.mxu0 0.0
    %139 = vmatprep.subr.mxu0 0.0
    %140 = vmatpush1.msra.mxu0 0.0
    %141 = vmatprep.subr.mxu0 0.0
    %142 = vmatpush1.msra.mxu0 0.0
    %143 = vmatprep.subr.mxu0 0.0
    %144 = vmatpush1.msra.mxu0 0.0
    %145 = vmatprep.subr.mxu0 0.0
    %146 = vmatpush1.msra.mxu0 0.0
    %147 = vmatprep.subr.mxu0 0.0
    %148 = vmatpush1.msra.mxu0 0.0
    %149 = vmatprep.subr.mxu0 0.0
    %150 = vmatpush1.msra.mxu0 0.0
    %151 = vmatprep.subr.mxu0 0.0
    %152 = vmatpush1.msra.mxu0 0.0
    %153 = vmatprep.subr.mxu0 0.0
    %154 = vmatpush1.msra.mxu0 0.0
    %155 = vmatprep.subr.mxu0 0.0
    %156 = vmatpush1.msra.mxu0 0.0
    %157 = vmatprep.subr.mxu0 0.0
    %158 = vmatpush1.msra.mxu0 0.0
    %159 = vmatprep.subr.mxu0 0.0
    %160 = vmatpush1.msra.mxu0 0.0
    %161 = vmatprep.subr.mxu0 0.0
    %162 = vmatpush1.msra.mxu0 0.0
    %163 = vmatprep.subr.mxu0 0.0
    %164 = vmatpush1.msra.mxu0 0.0
    %v165 = vand.u32 %v44, 4294901760
    %v166 = vsub.f32 %v44, %v165
    %v167 = vand.u32 %v166, 4294901760
    %v168 = vsub.f32 %v166, %v167
    %v169 = vand.u32 %v168, 4294901760
    %170 = vmatprep.subr.mxu0 %v169
    %v171 = vand.u32 %v42, 4294901760
    %v172 = vsub.f32 %v42, %v171
    %v173 = vand.u32 %v172, 4294901760
    %v174 = vsub.f32 %v172, %v173
    %v175 = vand.u32 %v174, 4294901760
    %176 = vmatpush1.msra.mxu0 %v175
    %177 = vmatprep.subr.mxu0 0.0
    %178 = vmatpush2.msra.mxu0 0.0
    %179 = vmatprep.subr.mxu0 0.0
    %180 = vmatpush2.msra.mxu0 0.0
    %181 = vmatprep.subr.mxu0 0.0
    %182 = vmatpush2.msra.mxu0 0.0
    %183 = vmatprep.subr.mxu0 0.0
    %184 = vmatpush2.msra.mxu0 0.0
    %185 = vmatprep.subr.mxu0 0.0
    %186 = vmatpush2.msra.mxu0 0.0
    %187 = vmatprep.subr.mxu0 0.0
    %188 = vmatpush2.msra.mxu0 0.0
    %189 = vmatprep.subr.mxu0 0.0
    %190 = vmatpush2.msra.mxu0 0.0
    %191 = vmatprep.subr.mxu0 0.0
    %192 = vmatpush2.msra.mxu0 0.0
    %193 = vmatprep.subr.mxu0 0.0
    %194 = vmatpush2.msra.mxu0 0.0
    %195 = vmatprep.subr.mxu0 0.0
    %196 = vmatpush2.msra.mxu0 0.0
    %197 = vmatprep.subr.mxu0 0.0
    %198 = vmatpush2.msra.mxu0 0.0
    %199 = vmatprep.subr.mxu0 0.0
    %200 = vmatpush2.msra.mxu0 0.0
    %201 = vmatprep.subr.mxu0 0.0
    %202 = vmatpush2.msra.mxu0 0.0
    %203 = vmatprep.subr.mxu0 0.0
    %204 = vmatpush2.msra.mxu0 0.0
    %205 = vmatprep.subr.mxu0 0.0
    %206 = vmatpush2.msra.mxu0 0.0
    %207 = vmatprep.subr.mxu0 0.0
    %208 = vmatpush2.msra.mxu0 0.0
    %209 = vmatprep.mubr.f32.mxu0 0.0
    %v210 = vand.u32 %v36, 4294901760
    %211 = vmatmul.mubr.f32.gmra.mxu0 %v210
    %v212 = vpop.f32.mrf.mxu0
    %v213 = vadd.f32 %v120, %v212
    %v214 = vpop.f32.mrf.mxu0
    %v215 = vadd.f32 %v122, %v214
    %216 = vmatprep.mubr.f32.mxu0 0.0
    %v217 = vand.u32 %v39, 4294901760
    %218 = vmatmul.mubr.f32.gmra.mxu0 %v217
    %v219 = vpop.f32.mrf.mxu0
    %v220 = vadd.f32 %v131, %v219
    %v221 = vpop.f32.mrf.mxu0
    %v222 = vadd.f32 %v133, %v221
    %223 = vdwg.mxu0
    %224 = vmatprep.subr.mxu0 0.0
    %225 = vmatpush1.msra.mxu0 0.0
    %226 = vmatprep.subr.mxu0 0.0
    %227 = vmatpush1.msra.mxu0 0.0
    %228 = vmatprep.subr.mxu0 0.0
    %229 = vmatpush1.msra.mxu0 0.0
    %230 = vmatprep.subr.mxu0 0.0
    %231 = vmatpush1.msra.mxu0 0.0
    %232 = vmatprep.subr.mxu0 0.0
    %233 = vmatpush1.msra.mxu0 0.0
    %234 = vmatprep.subr.mxu0 0.0
    %235 = vmatpush1.msra.mxu0 0.0
    %236 = vmatprep.subr.mxu0 0.0
    %237 = vmatpush1.msra.mxu0 0.0
    %238 = vmatprep.subr.mxu0 0.0
    %239 = vmatpush1.msra.mxu0 0.0
    %240 = vmatprep.subr.mxu0 0.0
    %241 = vmatpush1.msra.mxu0 0.0
    %242 = vmatprep.subr.mxu0 0.0
    %243 = vmatpush1.msra.mxu0 0.0
    %244 = vmatprep.subr.mxu0 0.0
    %245 = vmatpush1.msra.mxu0 0.0
    %246 = vmatprep.subr.mxu0 0.0
    %247 = vmatpush1.msra.mxu0 0.0
    %248 = vmatprep.subr.mxu0 0.0
    %249 = vmatpush1.msra.mxu0 0.0
    %250 = vmatprep.subr.mxu0 0.0
    %251 = vmatpush1.msra.mxu0 0.0
    %252 = vmatprep.subr.mxu0 0.0
    %253 = vmatpush1.msra.mxu0 0.0
    %v254 = vand.u32 %v44, 4294901760
    %v255 = vsub.f32 %v44, %v254
    %256 = vmatprep.subr.mxu0 %v255
    %v257 = vand.u32 %v42, 4294901760
    %v258 = vsub.f32 %v42, %v257
    %259 = vmatpush1.msra.mxu0 %v258
    %260 = vmatprep.subr.mxu0 0.0
    %261 = vmatpush2.msra.mxu0 0.0
    %262 = vmatprep.subr.mxu0 0.0
    %263 = vmatpush2.msra.mxu0 0.0
    %264 = vmatprep.subr.mxu0 0.0
    %265 = vmatpush2.msra.mxu0 0.0
    %266 = vmatprep.subr.mxu0 0.0
    %267 = vmatpush2.msra.mxu0 0.0
    %268 = vmatprep.subr.mxu0 0.0
    %269 = vmatpush2.msra.mxu0 0.0
    %270 = vmatprep.subr.mxu0 0.0
    %271 = vmatpush2.msra.mxu0 0.0
    %272 = vmatprep.subr.mxu0 0.0
    %273 = vmatpush2.msra.mxu0 0.0
    %274 = vmatprep.subr.mxu0 0.0
    %275 = vmatpush2.msra.mxu0 0.0
    %276 = vmatprep.subr.mxu0 0.0
    %277 = vmatpush2.msra.mxu0 0.0
    %278 = vmatprep.subr.mxu0 0.0
    %279 = vmatpush2.msra.mxu0 0.0
    %280 = vmatprep.subr.mxu0 0.0
    %281 = vmatpush2.msra.mxu0 0.0
    %282 = vmatprep.subr.mxu0 0.0
    %283 = vmatpush2.msra.mxu0 0.0
    %284 = vmatprep.subr.mxu0 0.0
    %285 = vmatpush2.msra.mxu0 0.0
    %286 = vmatprep.subr.mxu0 0.0
    %287 = vmatpush2.msra.mxu0 0.0
    %288 = vmatprep.subr.mxu0 0.0
    %289 = vmatpush2.msra.mxu0 0.0
    %290 = vmatprep.subr.mxu0 0.0
    %291 = vmatpush2.msra.mxu0 0.0
    %292 = vmatprep.mubr.f32.mxu0 0.0
    %v293 = vand.u32 %v36, 4294901760
    %v294 = vsub.f32 %v36, %v293
    %295 = vmatmul.mubr.f32.gmra.mxu0 %v294
    %v296 = vpop.f32.mrf.mxu0
    %v297 = vadd.f32 %v213, %v296
    %v298 = vpop.f32.mrf.mxu0
    %v299 = vadd.f32 %v215, %v298
    %300 = vmatprep.mubr.f32.mxu0 0.0
    %v301 = vand.u32 %v39, 4294901760
    %v302 = vsub.f32 %v39, %v301
    %303 = vmatmul.mubr.f32.gmra.mxu0 %v302
    %v304 = vpop.f32.mrf.mxu0
    %v305 = vadd.f32 %v220, %v304
    %v306 = vpop.f32.mrf.mxu0
    %v307 = vadd.f32 %v222, %v306
    %308 = vdwg.mxu0
    %309 = vmatprep.subr.mxu0 0.0
    %310 = vmatpush1.msra.mxu0 0.0
    %311 = vmatprep.subr.mxu0 0.0
    %312 = vmatpush1.msra.mxu0 0.0
    %313 = vmatprep.subr.mxu0 0.0
    %314 = vmatpush1.msra.mxu0 0.0
    %315 = vmatprep.subr.mxu0 0.0
    %316 = vmatpush1.msra.mxu0 0.0
    %317 = vmatprep.subr.mxu0 0.0
    %318 = vmatpush1.msra.mxu0 0.0
    %319 = vmatprep.subr.mxu0 0.0
    %320 = vmatpush1.msra.mxu0 0.0
    %321 = vmatprep.subr.mxu0 0.0
    %322 = vmatpush1.msra.mxu0 0.0
    %323 = vmatprep.subr.mxu0 0.0
    %324 = vmatpush1.msra.mxu0 0.0
    %325 = vmatprep.subr.mxu0 0.0
    %326 = vmatpush1.msra.mxu0 0.0
    %327 = vmatprep.subr.mxu0 0.0
    %328 = vmatpush1.msra.mxu0 0.0
    %329 = vmatprep.subr.mxu0 0.0
    %330 = vmatpush1.msra.mxu0 0.0
    %331 = vmatprep.subr.mxu0 0.0
    %332 = vmatpush1.msra.mxu0 0.0
    %333 = vmatprep.subr.mxu0 0.0
    %334 = vmatpush1.msra.mxu0 0.0
    %335 = vmatprep.subr.mxu0 0.0
    %336 = vmatpush1.msra.mxu0 0.0
    %337 = vmatprep.subr.mxu0 0.0
    %338 = vmatpush1.msra.mxu0 0.0
    %v339 = vand.u32 %v44, 4294901760
    %340 = vmatprep.subr.mxu0 %v339
    %v341 = vand.u32 %v42, 4294901760
    %342 = vmatpush1.msra.mxu0 %v341
    %343 = vmatprep.subr.mxu0 0.0
    %344 = vmatpush2.msra.mxu0 0.0
    %345 = vmatprep.subr.mxu0 0.0
    %346 = vmatpush2.msra.mxu0 0.0
    %347 = vmatprep.subr.mxu0 0.0
    %348 = vmatpush2.msra.mxu0 0.0
    %349 = vmatprep.subr.mxu0 0.0
    %350 = vmatpush2.msra.mxu0 0.0
    %351 = vmatprep.subr.mxu0 0.0
    %352 = vmatpush2.msra.mxu0 0.0
    %353 = vmatprep.subr.mxu0 0.0
    %354 = vmatpush2.msra.mxu0 0.0
    %355 = vmatprep.subr.mxu0 0.0
    %356 = vmatpush2.msra.mxu0 0.0
    %357 = vmatprep.subr.mxu0 0.0
    %358 = vmatpush2.msra.mxu0 0.0
    %359 = vmatprep.subr.mxu0 0.0
    %360 = vmatpush2.msra.mxu0 0.0
    %361 = vmatprep.subr.mxu0 0.0
    %362 = vmatpush2.msra.mxu0 0.0
    %363 = vmatprep.subr.mxu0 0.0
    %364 = vmatpush2.msra.mxu0 0.0
    %365 = vmatprep.subr.mxu0 0.0
    %366 = vmatpush2.msra.mxu0 0.0
    %367 = vmatprep.subr.mxu0 0.0
    %368 = vmatpush2.msra.mxu0 0.0
    %369 = vmatprep.subr.mxu0 0.0
    %370 = vmatpush2.msra.mxu0 0.0
    %371 = vmatprep.subr.mxu0 0.0
    %372 = vmatpush2.msra.mxu0 0.0
    %373 = vmatprep.subr.mxu0 0.0
    %374 = vmatpush2.msra.mxu0 0.0
    %375 = vmatprep.mubr.f32.mxu0 0.0
    %v376 = vand.u32 %v36, 4294901760
    %v377 = vsub.f32 %v36, %v376
    %v378 = vand.u32 %v377, 4294901760
    %379 = vmatmul.mubr.f32.gmra.mxu0 %v378
    %v380 = vpop.f32.mrf.mxu0
    %v381 = vadd.f32 %v297, %v380
    %v382 = vpop.f32.mrf.mxu0
    %v383 = vadd.f32 %v299, %v382
    %384 = vmatprep.mubr.f32.mxu0 0.0
    %v385 = vand.u32 %v39, 4294901760
    %v386 = vsub.f32 %v39, %v385
    %v387 = vand.u32 %v386, 4294901760
    %388 = vmatmul.mubr.f32.gmra.mxu0 %v387
    %v389 = vpop.f32.mrf.mxu0
    %v390 = vadd.f32 %v305, %v389
    %v391 = vpop.f32.mrf.mxu0
    %v392 = vadd.f32 %v307, %v391
    %393 = vdwg.mxu0
    %394 = vmatprep.subr.mxu0 0.0
    %395 = vmatpush1.msra.mxu0 0.0
    %396 = vmatprep.subr.mxu0 0.0
    %397 = vmatpush1.msra.mxu0 0.0
    %398 = vmatprep.subr.mxu0 0.0
    %399 = vmatpush1.msra.mxu0 0.0
    %400 = vmatprep.subr.mxu0 0.0
    %401 = vmatpush1.msra.mxu0 0.0
    %402 = vmatprep.subr.mxu0 0.0
    %403 = vmatpush1.msra.mxu0 0.0
    %404 = vmatprep.subr.mxu0 0.0
    %405 = vmatpush1.msra.mxu0 0.0
    %406 = vmatprep.subr.mxu0 0.0
    %407 = vmatpush1.msra.mxu0 0.0
    %408 = vmatprep.subr.mxu0 0.0
    %409 = vmatpush1.msra.mxu0 0.0
    %410 = vmatprep.subr.mxu0 0.0
    %411 = vmatpush1.msra.mxu0 0.0
    %412 = vmatprep.subr.mxu0 0.0
    %413 = vmatpush1.msra.mxu0 0.0
    %414 = vmatprep.subr.mxu0 0.0
    %415 = vmatpush1.msra.mxu0 0.0
    %416 = vmatprep.subr.mxu0 0.0
    %417 = vmatpush1.msra.mxu0 0.0
    %418 = vmatprep.subr.mxu0 0.0
    %419 = vmatpush1.msra.mxu0 0.0
    %420 = vmatprep.subr.mxu0 0.0
    %421 = vmatpush1.msra.mxu0 0.0
    %422 = vmatprep.subr.mxu0 0.0
    %423 = vmatpush1.msra.mxu0 0.0
    %v424 = vand.u32 %v44, 4294901760
    %v425 = vsub.f32 %v44, %v424
    %v426 = vand.u32 %v425, 4294901760
    %427 = vmatprep.subr.mxu0 %v426
    %v428 = vand.u32 %v42, 4294901760
    %v429 = vsub.f32 %v42, %v428
    %v430 = vand.u32 %v429, 4294901760
    %431 = vmatpush1.msra.mxu0 %v430
    %432 = vmatprep.subr.mxu0 0.0
    %433 = vmatpush2.msra.mxu0 0.0
    %434 = vmatprep.subr.mxu0 0.0
    %435 = vmatpush2.msra.mxu0 0.0
    %436 = vmatprep.subr.mxu0 0.0
    %437 = vmatpush2.msra.mxu0 0.0
    %438 = vmatprep.subr.mxu0 0.0
    %439 = vmatpush2.msra.mxu0 0.0
    %440 = vmatprep.subr.mxu0 0.0
    %441 = vmatpush2.msra.mxu0 0.0
    %442 = vmatprep.subr.mxu0 0.0
    %443 = vmatpush2.msra.mxu0 0.0
    %444 = vmatprep.subr.mxu0 0.0
    %445 = vmatpush2.msra.mxu0 0.0
    %446 = vmatprep.subr.mxu0 0.0
    %447 = vmatpush2.msra.mxu0 0.0
    %448 = vmatprep.subr.mxu0 0.0
    %449 = vmatpush2.msra.mxu0 0.0
    %450 = vmatprep.subr.mxu0 0.0
    %451 = vmatpush2.msra.mxu0 0.0
    %452 = vmatprep.subr.mxu0 0.0
    %453 = vmatpush2.msra.mxu0 0.0
    %454 = vmatprep.subr.mxu0 0.0
    %455 = vmatpush2.msra.mxu0 0.0
    %456 = vmatprep.subr.mxu0 0.0
    %457 = vmatpush2.msra.mxu0 0.0
    %458 = vmatprep.subr.mxu0 0.0
    %459 = vmatpush2.msra.mxu0 0.0
    %460 = vmatprep.subr.mxu0 0.0
    %461 = vmatpush2.msra.mxu0 0.0
    %462 = vmatprep.subr.mxu0 0.0
    %463 = vmatpush2.msra.mxu0 0.0
    %464 = vmatprep.mubr.f32.mxu0 0.0
    %v465 = vand.u32 %v36, 4294901760
    %466 = vmatmul.mubr.f32.gmra.mxu0 %v465
    %v467 = vpop.f32.mrf.mxu0
    %v468 = vadd.f32 %v381, %v467
    %v469 = vpop.f32.mrf.mxu0
    %v470 = vadd.f32 %v383, %v469
    %471 = vmatprep.mubr.f32.mxu0 0.0
    %v472 = vand.u32 %v39, 4294901760
    %473 = vmatmul.mubr.f32.gmra.mxu0 %v472
    %v474 = vpop.f32.mrf.mxu0
    %v475 = vadd.f32 %v390, %v474
    %v476 = vpop.f32.mrf.mxu0
    %v477 = vadd.f32 %v392, %v476
    %478 = vdwg.mxu0
    %479 = vmatprep.subr.mxu0 0.0
    %480 = vmatpush1.msra.mxu0 0.0
    %481 = vmatprep.subr.mxu0 0.0
    %482 = vmatpush1.msra.mxu0 0.0
    %483 = vmatprep.subr.mxu0 0.0
    %484 = vmatpush1.msra.mxu0 0.0
    %485 = vmatprep.subr.mxu0 0.0
    %486 = vmatpush1.msra.mxu0 0.0
    %487 = vmatprep.subr.mxu0 0.0
    %488 = vmatpush1.msra.mxu0 0.0
    %489 = vmatprep.subr.mxu0 0.0
    %490 = vmatpush1.msra.mxu0 0.0
    %491 = vmatprep.subr.mxu0 0.0
    %492 = vmatpush1.msra.mxu0 0.0
    %493 = vmatprep.subr.mxu0 0.0
    %494 = vmatpush1.msra.mxu0 0.0
    %495 = vmatprep.subr.mxu0 0.0
    %496 = vmatpush1.msra.mxu0 0.0
    %497 = vmatprep.subr.mxu0 0.0
    %498 = vmatpush1.msra.mxu0 0.0
    %499 = vmatprep.subr.mxu0 0.0
    %500 = vmatpush1.msra.mxu0 0.0
    %501 = vmatprep.subr.mxu0 0.0
    %502 = vmatpush1.msra.mxu0 0.0
    %503 = vmatprep.subr.mxu0 0.0
    %504 = vmatpush1.msra.mxu0 0.0
    %505 = vmatprep.subr.mxu0 0.0
    %506 = vmatpush1.msra.mxu0 0.0
    %507 = vmatprep.subr.mxu0 0.0
    %508 = vmatpush1.msra.mxu0 0.0
    %v509 = vand.u32 %v44, 4294901760
    %510 = vmatprep.subr.mxu0 %v509
    %v511 = vand.u32 %v42, 4294901760
    %512 = vmatpush1.msra.mxu0 %v511
    %513 = vmatprep.subr.mxu0 0.0
    %514 = vmatpush2.msra.mxu0 0.0
    %515 = vmatprep.subr.mxu0 0.0
    %516 = vmatpush2.msra.mxu0 0.0
    %517 = vmatprep.subr.mxu0 0.0
    %518 = vmatpush2.msra.mxu0 0.0
    %519 = vmatprep.subr.mxu0 0.0
    %520 = vmatpush2.msra.mxu0 0.0
    %521 = vmatprep.subr.mxu0 0.0
    %522 = vmatpush2.msra.mxu0 0.0
    %523 = vmatprep.subr.mxu0 0.0
    %524 = vmatpush2.msra.mxu0 0.0
    %525 = vmatprep.subr.mxu0 0.0
    %526 = vmatpush2.msra.mxu0 0.0
    %527 = vmatprep.subr.mxu0 0.0
    %528 = vmatpush2.msra.mxu0 0.0
    %529 = vmatprep.subr.mxu0 0.0
    %530 = vmatpush2.msra.mxu0 0.0
    %531 = vmatprep.subr.mxu0 0.0
    %532 = vmatpush2.msra.mxu0 0.0
    %533 = vmatprep.subr.mxu0 0.0
    %534 = vmatpush2.msra.mxu0 0.0
    %535 = vmatprep.subr.mxu0 0.0
    %536 = vmatpush2.msra.mxu0 0.0
    %537 = vmatprep.subr.mxu0 0.0
    %538 = vmatpush2.msra.mxu0 0.0
    %539 = vmatprep.subr.mxu0 0.0
    %540 = vmatpush2.msra.mxu0 0.0
    %541 = vmatprep.subr.mxu0 0.0
    %542 = vmatpush2.msra.mxu0 0.0
    %543 = vmatprep.subr.mxu0 0.0
    %544 = vmatpush2.msra.mxu0 0.0
    %545 = vmatprep.mubr.f32.mxu0 0.0
    %v546 = vand.u32 %v36, 4294901760
    %547 = vmatmul.mubr.f32.gmra.mxu0 %v546
    %v548 = vpop.f32.mrf.mxu0
    %v549 = vadd.f32 %v468, %v548
    %v550 = vpop.f32.mrf.mxu0
    %v551 = vadd.f32 %v470, %v550
    %552 = vmatprep.mubr.f32.mxu0 0.0
    %v553 = vand.u32 %v39, 4294901760
    %554 = vmatmul.mubr.f32.gmra.mxu0 %v553
    %v555 = vpop.f32.mrf.mxu0
    %v556 = vadd.f32 %v475, %v555
    %v557 = vpop.f32.mrf.mxu0
    %v558 = vadd.f32 %v477, %v557
    %559 = vdwg.mxu0
    %v560 = vld [vmem:[#allocation2] sm:$0xff]
    %v561 = vld [vmem:[#allocation2 + $0x8] sm:$0xff]
    %v562 = vld [vmem:[#allocation2 + $0x10] sm:$0xff]
    %v563 = vld [vmem:[#allocation2 + $0x18] sm:$0xff]
    %v564 = vmul.f32 %v549, 0.5
    %v565 = vmul.f32 %v551, 0.5
    %v566 = vmul.f32 %v556, 0.5
    %v567 = vmul.f32 %v558, 0.5
    %v568 = vadd.f32 %v560, %v564
    %v569 = vadd.f32 %v561, %v565
    %v570 = vadd.f32 %v562, %v566
    %v571 = vadd.f32 %v563, %v567
    %572 = vst [vmem:[#allocation5] sm:$0xff] %v568
    %573 = vst [vmem:[#allocation5 + $0x8] sm:$0xff] %v569
    %574 = vst [vmem:[#allocation5 + $0x10] sm:$0xff] %v570
    %575 = vst [vmem:[#allocation5 + $0x18] sm:$0xff] %v571
    // Predicated region
    $region18: #{tpu_custom_call.1} parent=1 // pred_check
      _
    $region19: #{tpu_custom_call.1} parent=1 // pred_check_branch
      %577 = sbr.rel (0) target = $region21
    $region20: #{tpu_custom_call.1} parent=1 // pred_region
      %s579 = ssub.s32 512, 512
      %580 = vsyncadd [#allocation4], %s579
      %s581 = sshll.u32 [#allocation5], 4
      %s582 = int_to_ptr.vmem [resolvable:$true] %s581
      %587 = dma.vmem_to_hbm [thread:$0]  %s582, 512, %s3, [#allocation4], 256, 256, 16
    $region21: #{tpu_custom_call.1} parent=1 // pred_fallthru
      _
    // Predicated region
    $region22: #{tpu_custom_call.1} parent=1 // pred_check
      _
    $region23: #{tpu_custom_call.1} parent=1 // pred_check_branch
      %589 = sbr.rel (0) target = $region25
    $region24: #{tpu_custom_call.1} parent=1 // pred_region
      %590 = dma.done [#allocation4], 512
    $region25: #{tpu_custom_call.1} parent=1 // pred_fallthru
      _
    %591 = vsyncpa [#allocation3], 1
    %592 = vsyncpa [#allocation4], 1

</llo_original>
